<compile_context>
chip_gen: v7x
topology: tpu7x:2x2x1
jax: 0.10.0
libtpu: 0.0.40
codegen_flags: <defaults>
</compile_context>

<pallas_src>
import functools

import jax
import jax.numpy as jnp
from jax.experimental import pallas as pl
from jax.experimental.pallas import tpu as pltpu

_VMEM = pl.BlockSpec(memory_space=pltpu.MemorySpace.VMEM)


# ---------------------------------------------------------------------------
# In-kernel readout: cat([global_sum, global_mean, global_max], -1)  -> (B, 3H)
# (pure value-level helper, traced inside the fused kernel body)
# ---------------------------------------------------------------------------
def _readout_vals(x, mask_t, counts):
    # segment sums for ALL graphs in one MXU pass: (B, N) @ (N, H) -> (B, H)
    s = jnp.dot(mask_t, x, preferred_element_type=jnp.float32)
    # mean: divide by node count (guard empty graphs), reciprocal on the EUP
    inv_cnt = pl.reciprocal(jnp.maximum(counts, 1.0), approx=True)      # (B, 1)
    mean = s * inv_cnt
    # masked max for all graphs at once via broadcasting: (B, N, H) -> (B, H)
    masked = jnp.where(mask_t[:, :, None] > 0.0, x[None, :, :], -jnp.inf)
    mx = jnp.max(masked, axis=1)
    mx = jnp.where(counts > 0.0, mx, 0.0)                               # empty-graph guard
    # torch.cat((x_sum, x_mean, x_max), dim=-1)
    return jnp.concatenate([s, mean, mx], axis=-1)                      # (B, 3H)


# ---------------------------------------------------------------------------
# Single fused kernel: GAS linears (stand-in) + readouts + xs accumulation
# + MLP head (lin1/relu/lin2/relu/lin3) + log_softmax.
# ---------------------------------------------------------------------------
def _net_kernel(*refs, num_layers):
    x_ref, mask_ref, cnt_ref = refs[0], refs[1], refs[2]
    p = 3
    gas = [(refs[p + 2 * i], refs[p + 2 * i + 1]) for i in range(num_layers)]
    p += 2 * num_layers
    w1_ref, b1_ref, w2_ref, b2_ref, w3_ref, b3_ref = refs[p:p + 6]
    o_ref = refs[p + 6]

    x = x_ref[...]                                   # (N, F)
    mask_t = mask_ref[...]                           # (B, N) one-hot membership
    counts = cnt_ref[...]                            # (B, 1) nodes per graph

    # TODO(synk): GAS layer's attention + top-k node-sampling internals are not
    # provided in the reference source; stand-in is a per-node linear map.
    # layer1: xs = readout(x) on the raw layer output (no ReLU, as in Net.forward)
    w, b = gas[0]
    x = jnp.dot(x, w[...], preferred_element_type=jnp.float32) + b[...]
    xs = _readout_vals(x, mask_t, counts)

    # remaining layers: x = relu(layer(x)); xs += readout(x)
    for i in range(1, num_layers):
        w, b = gas[i]
        x = jnp.dot(x, w[...], preferred_element_type=jnp.float32) + b[...]
        x = jnp.maximum(x, 0.0)
        xs = xs + _readout_vals(x, mask_t, counts)

    # MLP head; F.dropout(p=0.5, training=False) is identity at inference time
    h = jnp.dot(xs, w1_ref[...], preferred_element_type=jnp.float32) + b1_ref[...]
    h = jnp.maximum(h, 0.0)
    h = jnp.dot(h, w2_ref[...], preferred_element_type=jnp.float32) + b2_ref[...]
    h = jnp.maximum(h, 0.0)
    logits = jnp.dot(h, w3_ref[...], preferred_element_type=jnp.float32) + b3_ref[...]

    # log_softmax(dim=-1)
    m = jnp.max(logits, axis=-1, keepdims=True)
    lse = m + jnp.log(jnp.sum(jnp.exp(logits - m), axis=-1, keepdims=True))
    o_ref[...] = (logits - lse).astype(o_ref.dtype)   # single lane-contiguous store


# ---------------------------------------------------------------------------
# Wrapper: one pallas_call for the whole forward (mirrors Net.forward).
# ---------------------------------------------------------------------------
def net_forward(x, edge_index, mask, params):
    del edge_index  # unused by the GAS stand-in (see TODO in kernel)

    mask_t = mask.T.astype(jnp.float32)                       # (B, N)
    counts = jnp.sum(mask_t, axis=1, keepdims=True)           # (B, 1)

    num_layers = len(params["gas_w"])
    num_graphs = mask_t.shape[0]
    num_classes = params["w3"].shape[1]

    args = [x, mask_t, counts]
    for w, b in zip(params["gas_w"], params["gas_b"]):
        args += [w, b.reshape(1, -1)]
    args += [params["w1"], params["b1"].reshape(1, -1),
             params["w2"], params["b2"].reshape(1, -1),
             params["w3"], params["b3"].reshape(1, -1)]

    out = pl.pallas_call(
        functools.partial(_net_kernel, num_layers=num_layers),
        out_shape=jax.ShapeDtypeStruct((num_graphs, num_classes), jnp.float32),
        in_specs=[_VMEM] * len(args),
        out_specs=_VMEM,
    )(*args)
    return out, 0


# ---------------------------------------------------------------------------
# Parameters (deterministic, torch.nn.Linear-style uniform init).
# ---------------------------------------------------------------------------
def init_params(key, num_features, nhid, num_classes, num_layers):
    def dense(k, fin, fout):
        kw, kb = jax.random.split(k)
        lim = 1.0 / float(fin) ** 0.5
        w = jax.random.uniform(kw, (fin, fout), jnp.float32, -lim, lim)
        b = jax.random.uniform(kb, (fout,), jnp.float32, -lim, lim)
        return w, b

    keys = jax.random.split(key, num_layers + 3)
    gas_w, gas_b = [], []
    w, b = dense(keys[0], num_features, nhid)
    gas_w.append(w); gas_b.append(b)
    for i in range(num_layers - 1):
        w, b = dense(keys[1 + i], nhid, nhid)
        gas_w.append(w); gas_b.append(b)
    w1, b1 = dense(keys[num_layers + 0], 3 * nhid, nhid)
    w2, b2 = dense(keys[num_layers + 1], nhid, nhid // 2)
    w3, b3 = dense(keys[num_layers + 2], nhid // 2, num_classes)
    return dict(gas_w=gas_w, gas_b=gas_b,
                w1=w1, b1=b1, w2=w2, b2=b2, w3=w3, b3=b3)


if __name__ == "__main__":
    # args: num_features=8, nhid=32, num_classes=4, num_layers=3
    num_features, nhid, num_classes, num_layers = 8, 32, 4, 3
    N, B = 16, 2                                    # 16 nodes, 2 graphs

    key = jax.random.PRNGKey(0)
    kx, kp = jax.random.split(key)

    x = jax.random.normal(kx, (N, num_features), dtype=jnp.float32)
    batch = jnp.repeat(jnp.arange(B, dtype=jnp.int32), N // B)             # [N]
    mask = (batch[:, None] == jnp.arange(B)[None, :]).astype(jnp.float32)  # [N, B]
    # edge_index kept for interface parity with the torch module (unused by the
    # GAS stand-in).
    edge_index = jnp.stack([jnp.arange(N, dtype=jnp.int32),
                            (jnp.arange(N, dtype=jnp.int32) + 1) % N])

    params = init_params(kp, num_features, nhid, num_classes, num_layers)

    out, aux = net_forward(x, edge_index, mask, params)
    out = jax.block_until_ready(out)
    assert out.shape == (B, num_classes)
    assert bool(jnp.all(jnp.isfinite(out)))
    print("KERNEL_OK")
</pallas_src>

<mosaic_0001>
module attributes {stable_mosaic.version = 11 : i64} {
  func.func @_net_kernel(%arg0: memref<16x8xf32, #tpu.memory_space<vmem>>, %arg1: memref<2x16xf32, #tpu.memory_space<vmem>>, %arg2: memref<2x1xf32, #tpu.memory_space<vmem>>, %arg3: memref<8x32xf32, #tpu.memory_space<vmem>>, %arg4: memref<1x32xf32, #tpu.memory_space<vmem>>, %arg5: memref<32x32xf32, #tpu.memory_space<vmem>>, %arg6: memref<1x32xf32, #tpu.memory_space<vmem>>, %arg7: memref<32x32xf32, #tpu.memory_space<vmem>>, %arg8: memref<1x32xf32, #tpu.memory_space<vmem>>, %arg9: memref<96x32xf32, #tpu.memory_space<vmem>>, %arg10: memref<1x32xf32, #tpu.memory_space<vmem>>, %arg11: memref<32x16xf32, #tpu.memory_space<vmem>>, %arg12: memref<1x16xf32, #tpu.memory_space<vmem>>, %arg13: memref<16x4xf32, #tpu.memory_space<vmem>>, %arg14: memref<1x4xf32, #tpu.memory_space<vmem>>, %arg15: memref<2x4xf32, #tpu.memory_space<vmem>>) attributes {dimension_semantics = [], scalar_prefetch = 0 : i64, scratch_operands = 0 : i64, tpu.core_type = #tpu.core_type<tc>} {
    %c0 = arith.constant 0 : index
    %c0_0 = arith.constant 0 : index
    %0 = vector.load %arg0[%c0, %c0_0] : memref<16x8xf32, #tpu.memory_space<vmem>>, vector<16x8xf32>
    %c0_1 = arith.constant 0 : index
    %c0_2 = arith.constant 0 : index
    %1 = vector.load %arg1[%c0_1, %c0_2] : memref<2x16xf32, #tpu.memory_space<vmem>>, vector<2x16xf32>
    %c0_3 = arith.constant 0 : index
    %c0_4 = arith.constant 0 : index
    %2 = vector.load %arg2[%c0_3, %c0_4] : memref<2x1xf32, #tpu.memory_space<vmem>>, vector<2x1xf32>
    %c0_5 = arith.constant 0 : index
    %c0_6 = arith.constant 0 : index
    %3 = vector.load %arg3[%c0_5, %c0_6] : memref<8x32xf32, #tpu.memory_space<vmem>>, vector<8x32xf32>
    %cst = arith.constant dense<0.000000e+00> : vector<16x32xf32>
    %4 = tpu.matmul %0, %3, %cst {dimension_numbers = #tpu.dot_dimension_numbers<[1], [0], [0], [1], [0, 0, 1, 1], [], []>} : vector<16x8xf32>, vector<8x32xf32>, vector<16x32xf32> -> vector<16x32xf32>
    %c0_7 = arith.constant 0 : index
    %c0_8 = arith.constant 0 : index
    %5 = vector.load %arg4[%c0_7, %c0_8] : memref<1x32xf32, #tpu.memory_space<vmem>>, vector<1x32xf32>
    %6 = vector.broadcast %5 : vector<1x32xf32> to vector<16x32xf32>
    %7 = arith.addf %4, %6 : vector<16x32xf32>
    %cst_9 = arith.constant dense<0.000000e+00> : vector<2x32xf32>
    %8 = tpu.matmul %1, %7, %cst_9 {dimension_numbers = #tpu.dot_dimension_numbers<[1], [0], [0], [1], [0, 0, 1, 1], [], []>} : vector<2x16xf32>, vector<16x32xf32>, vector<2x32xf32> -> vector<2x32xf32>
    %cst_10 = arith.constant 1.000000e+00 : f32
    %9 = vector.broadcast %cst_10 : f32 to vector<2x1xf32>
    %10 = arith.maximumf %2, %9 : vector<2x1xf32>
    %11 = tpu.reciprocal %10 {approx = true} : vector<2x1xf32> -> vector<2x1xf32>
    %12 = vector.broadcast %11 : vector<2x1xf32> to vector<2x32xf32>
    %13 = arith.mulf %8, %12 : vector<2x32xf32>
    %14 = vector.shape_cast %1 : vector<2x16xf32> to vector<2x16x1xf32>
    %cst_11 = arith.constant 0.000000e+00 : f32
    %15 = vector.broadcast %cst_11 : f32 to vector<2x16x1xf32>
    %16 = arith.cmpf ogt, %14, %15 : vector<2x16x1xf32>
    %17 = vector.shape_cast %7 : vector<16x32xf32> to vector<1x16x32xf32>
    %cst_12 = arith.constant 0xFF800000 : f32
    %18 = vector.shape_cast %16 : vector<2x16x1xi1> to vector<2x16x1xi1>
    %19 = vector.broadcast %18 : vector<2x16x1xi1> to vector<2x16x32xi1>
    %20 = vector.shape_cast %17 : vector<1x16x32xf32> to vector<1x16x32xf32>
    %21 = vector.broadcast %20 : vector<1x16x32xf32> to vector<2x16x32xf32>
    %22 = vector.broadcast %cst_12 : f32 to vector<2x16x32xf32>
    %23 = arith.select %19, %21, %22 : vector<2x16x32xi1>, vector<2x16x32xf32>
    %cst_13 = arith.constant dense<0xFF800000> : vector<2x32xf32>
    %24 = vector.multi_reduction <maximumf>, %23, %cst_13 [1] : vector<2x16x32xf32> to vector<2x32xf32>
    %cst_14 = arith.constant 0.000000e+00 : f32
    %25 = vector.broadcast %cst_14 : f32 to vector<2x1xf32>
    %26 = arith.cmpf ogt, %2, %25 : vector<2x1xf32>
    %cst_15 = arith.constant 0.000000e+00 : f32
    %27 = vector.shape_cast %26 : vector<2x1xi1> to vector<2x1xi1>
    %28 = vector.broadcast %27 : vector<2x1xi1> to vector<2x32xi1>
    %29 = vector.broadcast %cst_15 : f32 to vector<2x32xf32>
    %30 = arith.select %28, %24, %29 : vector<2x32xi1>, vector<2x32xf32>
    %31 = tpu.concatenate %8, %13, %30 in 1 : vector<2x32xf32>, vector<2x32xf32>, vector<2x32xf32> -> vector<2x96xf32>
    %c0_16 = arith.constant 0 : index
    %c0_17 = arith.constant 0 : index
    %32 = vector.load %arg5[%c0_16, %c0_17] : memref<32x32xf32, #tpu.memory_space<vmem>>, vector<32x32xf32>
    %cst_18 = arith.constant dense<0.000000e+00> : vector<16x32xf32>
    %33 = tpu.matmul %7, %32, %cst_18 {dimension_numbers = #tpu.dot_dimension_numbers<[1], [0], [0], [1], [0, 0, 1, 1], [], []>} : vector<16x32xf32>, vector<32x32xf32>, vector<16x32xf32> -> vector<16x32xf32>
    %c0_19 = arith.constant 0 : index
    %c0_20 = arith.constant 0 : index
    %34 = vector.load %arg6[%c0_19, %c0_20] : memref<1x32xf32, #tpu.memory_space<vmem>>, vector<1x32xf32>
    %35 = vector.broadcast %34 : vector<1x32xf32> to vector<16x32xf32>
    %36 = arith.addf %33, %35 : vector<16x32xf32>
    %cst_21 = arith.constant 0.000000e+00 : f32
    %37 = vector.broadcast %cst_21 : f32 to vector<16x32xf32>
    %38 = arith.maximumf %36, %37 : vector<16x32xf32>
    %cst_22 = arith.constant dense<0.000000e+00> : vector<2x32xf32>
    %39 = tpu.matmul %1, %38, %cst_22 {dimension_numbers = #tpu.dot_dimension_numbers<[1], [0], [0], [1], [0, 0, 1, 1], [], []>} : vector<2x16xf32>, vector<16x32xf32>, vector<2x32xf32> -> vector<2x32xf32>
    %cst_23 = arith.constant 1.000000e+00 : f32
    %40 = vector.broadcast %cst_23 : f32 to vector<2x1xf32>
    %41 = arith.maximumf %2, %40 : vector<2x1xf32>
    %42 = tpu.reciprocal %41 {approx = true} : vector<2x1xf32> -> vector<2x1xf32>
    %43 = vector.broadcast %42 : vector<2x1xf32> to vector<2x32xf32>
    %44 = arith.mulf %39, %43 : vector<2x32xf32>
    %45 = vector.shape_cast %1 : vector<2x16xf32> to vector<2x16x1xf32>
    %cst_24 = arith.constant 0.000000e+00 : f32
    %46 = vector.broadcast %cst_24 : f32 to vector<2x16x1xf32>
    %47 = arith.cmpf ogt, %45, %46 : vector<2x16x1xf32>
    %48 = vector.shape_cast %38 : vector<16x32xf32> to vector<1x16x32xf32>
    %cst_25 = arith.constant 0xFF800000 : f32
    %49 = vector.shape_cast %47 : vector<2x16x1xi1> to vector<2x16x1xi1>
    %50 = vector.broadcast %49 : vector<2x16x1xi1> to vector<2x16x32xi1>
    %51 = vector.shape_cast %48 : vector<1x16x32xf32> to vector<1x16x32xf32>
    %52 = vector.broadcast %51 : vector<1x16x32xf32> to vector<2x16x32xf32>
    %53 = vector.broadcast %cst_25 : f32 to vector<2x16x32xf32>
    %54 = arith.select %50, %52, %53 : vector<2x16x32xi1>, vector<2x16x32xf32>
    %cst_26 = arith.constant dense<0xFF800000> : vector<2x32xf32>
    %55 = vector.multi_reduction <maximumf>, %54, %cst_26 [1] : vector<2x16x32xf32> to vector<2x32xf32>
    %cst_27 = arith.constant 0.000000e+00 : f32
    %56 = vector.broadcast %cst_27 : f32 to vector<2x1xf32>
    %57 = arith.cmpf ogt, %2, %56 : vector<2x1xf32>
    %cst_28 = arith.constant 0.000000e+00 : f32
    %58 = vector.shape_cast %57 : vector<2x1xi1> to vector<2x1xi1>
    %59 = vector.broadcast %58 : vector<2x1xi1> to vector<2x32xi1>
    %60 = vector.broadcast %cst_28 : f32 to vector<2x32xf32>
    %61 = arith.select %59, %55, %60 : vector<2x32xi1>, vector<2x32xf32>
    %62 = tpu.concatenate %39, %44, %61 in 1 : vector<2x32xf32>, vector<2x32xf32>, vector<2x32xf32> -> vector<2x96xf32>
    %63 = arith.addf %31, %62 : vector<2x96xf32>
    %c0_29 = arith.constant 0 : index
    %c0_30 = arith.constant 0 : index
    %64 = vector.load %arg7[%c0_29, %c0_30] : memref<32x32xf32, #tpu.memory_space<vmem>>, vector<32x32xf32>
    %cst_31 = arith.constant dense<0.000000e+00> : vector<16x32xf32>
    %65 = tpu.matmul %38, %64, %cst_31 {dimension_numbers = #tpu.dot_dimension_numbers<[1], [0], [0], [1], [0, 0, 1, 1], [], []>} : vector<16x32xf32>, vector<32x32xf32>, vector<16x32xf32> -> vector<16x32xf32>
    %c0_32 = arith.constant 0 : index
    %c0_33 = arith.constant 0 : index
    %66 = vector.load %arg8[%c0_32, %c0_33] : memref<1x32xf32, #tpu.memory_space<vmem>>, vector<1x32xf32>
    %67 = vector.broadcast %66 : vector<1x32xf32> to vector<16x32xf32>
    %68 = arith.addf %65, %67 : vector<16x32xf32>
    %cst_34 = arith.constant 0.000000e+00 : f32
    %69 = vector.broadcast %cst_34 : f32 to vector<16x32xf32>
    %70 = arith.maximumf %68, %69 : vector<16x32xf32>
    %cst_35 = arith.constant dense<0.000000e+00> : vector<2x32xf32>
    %71 = tpu.matmul %1, %70, %cst_35 {dimension_numbers = #tpu.dot_dimension_numbers<[1], [0], [0], [1], [0, 0, 1, 1], [], []>} : vector<2x16xf32>, vector<16x32xf32>, vector<2x32xf32> -> vector<2x32xf32>
    %cst_36 = arith.constant 1.000000e+00 : f32
    %72 = vector.broadcast %cst_36 : f32 to vector<2x1xf32>
    %73 = arith.maximumf %2, %72 : vector<2x1xf32>
    %74 = tpu.reciprocal %73 {approx = true} : vector<2x1xf32> -> vector<2x1xf32>
    %75 = vector.broadcast %74 : vector<2x1xf32> to vector<2x32xf32>
    %76 = arith.mulf %71, %75 : vector<2x32xf32>
    %77 = vector.shape_cast %1 : vector<2x16xf32> to vector<2x16x1xf32>
    %cst_37 = arith.constant 0.000000e+00 : f32
    %78 = vector.broadcast %cst_37 : f32 to vector<2x16x1xf32>
    %79 = arith.cmpf ogt, %77, %78 : vector<2x16x1xf32>
    %80 = vector.shape_cast %70 : vector<16x32xf32> to vector<1x16x32xf32>
    %cst_38 = arith.constant 0xFF800000 : f32
    %81 = vector.shape_cast %79 : vector<2x16x1xi1> to vector<2x16x1xi1>
    %82 = vector.broadcast %81 : vector<2x16x1xi1> to vector<2x16x32xi1>
    %83 = vector.shape_cast %80 : vector<1x16x32xf32> to vector<1x16x32xf32>
    %84 = vector.broadcast %83 : vector<1x16x32xf32> to vector<2x16x32xf32>
    %85 = vector.broadcast %cst_38 : f32 to vector<2x16x32xf32>
    %86 = arith.select %82, %84, %85 : vector<2x16x32xi1>, vector<2x16x32xf32>
    %cst_39 = arith.constant dense<0xFF800000> : vector<2x32xf32>
    %87 = vector.multi_reduction <maximumf>, %86, %cst_39 [1] : vector<2x16x32xf32> to vector<2x32xf32>
    %cst_40 = arith.constant 0.000000e+00 : f32
    %88 = vector.broadcast %cst_40 : f32 to vector<2x1xf32>
    %89 = arith.cmpf ogt, %2, %88 : vector<2x1xf32>
    %cst_41 = arith.constant 0.000000e+00 : f32
    %90 = vector.shape_cast %89 : vector<2x1xi1> to vector<2x1xi1>
    %91 = vector.broadcast %90 : vector<2x1xi1> to vector<2x32xi1>
    %92 = vector.broadcast %cst_41 : f32 to vector<2x32xf32>
    %93 = arith.select %91, %87, %92 : vector<2x32xi1>, vector<2x32xf32>
    %94 = tpu.concatenate %71, %76, %93 in 1 : vector<2x32xf32>, vector<2x32xf32>, vector<2x32xf32> -> vector<2x96xf32>
    %95 = arith.addf %63, %94 : vector<2x96xf32>
    %c0_42 = arith.constant 0 : index
    %c0_43 = arith.constant 0 : index
    %96 = vector.load %arg9[%c0_42, %c0_43] : memref<96x32xf32, #tpu.memory_space<vmem>>, vector<96x32xf32>
    %cst_44 = arith.constant dense<0.000000e+00> : vector<2x32xf32>
    %97 = tpu.matmul %95, %96, %cst_44 {dimension_numbers = #tpu.dot_dimension_numbers<[1], [0], [0], [1], [0, 0, 1, 1], [], []>} : vector<2x96xf32>, vector<96x32xf32>, vector<2x32xf32> -> vector<2x32xf32>
    %c0_45 = arith.constant 0 : index
    %c0_46 = arith.constant 0 : index
    %98 = vector.load %arg10[%c0_45, %c0_46] : memref<1x32xf32, #tpu.memory_space<vmem>>, vector<1x32xf32>
    %99 = vector.broadcast %98 : vector<1x32xf32> to vector<2x32xf32>
    %100 = arith.addf %97, %99 : vector<2x32xf32>
    %cst_47 = arith.constant 0.000000e+00 : f32
    %101 = vector.broadcast %cst_47 : f32 to vector<2x32xf32>
    %102 = arith.maximumf %100, %101 : vector<2x32xf32>
    %c0_48 = arith.constant 0 : index
    %c0_49 = arith.constant 0 : index
    %103 = vector.load %arg11[%c0_48, %c0_49] : memref<32x16xf32, #tpu.memory_space<vmem>>, vector<32x16xf32>
    %cst_50 = arith.constant dense<0.000000e+00> : vector<2x16xf32>
    %104 = tpu.matmul %102, %103, %cst_50 {dimension_numbers = #tpu.dot_dimension_numbers<[1], [0], [0], [1], [0, 0, 1, 1], [], []>} : vector<2x32xf32>, vector<32x16xf32>, vector<2x16xf32> -> vector<2x16xf32>
    %c0_51 = arith.constant 0 : index
    %c0_52 = arith.constant 0 : index
    %105 = vector.load %arg12[%c0_51, %c0_52] : memref<1x16xf32, #tpu.memory_space<vmem>>, vector<1x16xf32>
    %106 = vector.broadcast %105 : vector<1x16xf32> to vector<2x16xf32>
    %107 = arith.addf %104, %106 : vector<2x16xf32>
    %cst_53 = arith.constant 0.000000e+00 : f32
    %108 = vector.broadcast %cst_53 : f32 to vector<2x16xf32>
    %109 = arith.maximumf %107, %108 : vector<2x16xf32>
    %c0_54 = arith.constant 0 : index
    %c0_55 = arith.constant 0 : index
    %110 = vector.load %arg13[%c0_54, %c0_55] : memref<16x4xf32, #tpu.memory_space<vmem>>, vector<16x4xf32>
    %cst_56 = arith.constant dense<0.000000e+00> : vector<2x4xf32>
    %111 = tpu.matmul %109, %110, %cst_56 {dimension_numbers = #tpu.dot_dimension_numbers<[1], [0], [0], [1], [0, 0, 1, 1], [], []>} : vector<2x16xf32>, vector<16x4xf32>, vector<2x4xf32> -> vector<2x4xf32>
    %c0_57 = arith.constant 0 : index
    %c0_58 = arith.constant 0 : index
    %112 = vector.load %arg14[%c0_57, %c0_58] : memref<1x4xf32, #tpu.memory_space<vmem>>, vector<1x4xf32>
    %113 = vector.broadcast %112 : vector<1x4xf32> to vector<2x4xf32>
    %114 = arith.addf %111, %113 : vector<2x4xf32>
    %cst_59 = arith.constant dense<0xFF800000> : vector<2xf32>
    %115 = vector.multi_reduction <maximumf>, %114, %cst_59 [1] : vector<2x4xf32> to vector<2xf32>
    %116 = vector.shape_cast %115 : vector<2xf32> to vector<2x1xf32>
    %117 = vector.broadcast %116 : vector<2x1xf32> to vector<2x4xf32>
    %118 = arith.subf %114, %117 : vector<2x4xf32>
    %119 = math.exp %118 : vector<2x4xf32>
    %cst_60 = arith.constant dense<0.000000e+00> : vector<2xf32>
    %120 = vector.multi_reduction <add>, %119, %cst_60 [1] : vector<2x4xf32> to vector<2xf32>
    %121 = vector.shape_cast %120 : vector<2xf32> to vector<2x1xf32>
    %122 = math.log %121 : vector<2x1xf32>
    %123 = arith.addf %116, %122 : vector<2x1xf32>
    %124 = vector.broadcast %123 : vector<2x1xf32> to vector<2x4xf32>
    %125 = arith.subf %114, %124 : vector<2x4xf32>
    %c0_61 = arith.constant 0 : index
    %c0_62 = arith.constant 0 : index
    %126 = vector.load %arg15[%c0_61, %c0_62] : memref<2x4xf32, #tpu.memory_space<vmem>>, vector<2x4xf32>
    tpu.vector_store %arg15[%c0_61, %c0_62], %125 {strides = array<i32>} : memref<2x4xf32, #tpu.memory_space<vmem>>, vector<2x4xf32>,
    return
  }
}

</mosaic_0001>

<llo_original>
// kernel: tpu_custom_call.1
$region0: #{tpu_custom_call.1}
  #allocation0 [shape = 'u32[]', space=smem, size = 0x4, offset = 0x4, fixed_abs, tag = 'smem constant byte address 0x4 - core index']
  #allocation1 [shape = 'u32[144,128]{1,0:T(1,128)}', space=vmem, size = 0x12000, scoped, tag = 'internal scratch']
  %s0 = inlined_call_operand.vmem [shape: f32[16,8], index: 0, kind: input, shape index: {}]
  %s1 = inlined_call_operand.vmem [shape: f32[2,16], index: 1, kind: input, shape index: {}]
  %s2 = inlined_call_operand.vmem [shape: f32[2,1], index: 2, kind: input, shape index: {}]
  %s3 = inlined_call_operand.vmem [shape: f32[8,32], index: 3, kind: input, shape index: {}]
  %s4 = inlined_call_operand.vmem [shape: f32[1,32], index: 4, kind: input, shape index: {}]
  %s5 = inlined_call_operand.vmem [shape: f32[32,32], index: 5, kind: input, shape index: {}]
  %s6 = inlined_call_operand.vmem [shape: f32[1,32], index: 6, kind: input, shape index: {}]
  %s7 = inlined_call_operand.vmem [shape: f32[32,32], index: 7, kind: input, shape index: {}]
  %s8 = inlined_call_operand.vmem [shape: f32[1,32], index: 8, kind: input, shape index: {}]
  %s9 = inlined_call_operand.vmem [shape: f32[96,32], index: 9, kind: input, shape index: {}]
  %s10 = inlined_call_operand.vmem [shape: f32[1,32], index: 10, kind: input, shape index: {}]
  %s11 = inlined_call_operand.vmem [shape: f32[32,16], index: 11, kind: input, shape index: {}]
  %s12 = inlined_call_operand.vmem [shape: f32[1,16], index: 12, kind: input, shape index: {}]
  %s13 = inlined_call_operand.vmem [shape: f32[16,4], index: 13, kind: input, shape index: {}]
  %s14 = inlined_call_operand.vmem [shape: f32[1,4], index: 14, kind: input, shape index: {}]
  %s15 = inlined_call_operand.hbm [shape: f32[2,4], index: 15, kind: output, shape index: {}]
  %s16 = sld [smem:[#allocation0]]
  $region70: #{tpu_custom_call.1} parent=0
    _
  %s18 = ssub.s32 1, %s16
  %s19 = scalar_select 0, %s18, %s16
  $region1: #{tpu_custom_call.1} parent=0
    #allocation2 [shape = 'u8[1024]{0}', space=vmem, size = 0x400, scoped, tag = 'output window, operand 0, single buffered']
    #allocation3 [shape = 's32[1]{0}', space=sflag, size = 0x4, scoped, tag = 'scoped memory for tpu_custom_call.1']
    %20 = vsyncpa [#allocation3], 0
    // Predicated region
    $region2: #{tpu_custom_call.1} parent=1 // pred_check
      _
    $region3: #{tpu_custom_call.1} parent=1 // pred_check_branch
      %22 = sbr.rel (0) target = $region5
    $region4: #{tpu_custom_call.1} parent=1 // pred_region
      _
    $region5: #{tpu_custom_call.1} parent=1 // pred_fallthru
      _
    // Predicated region
    $region6: #{tpu_custom_call.1} parent=1 // pred_check
      _
    $region7: #{tpu_custom_call.1} parent=1 // pred_check_branch
      %24 = sbr.rel (0) target = $region9
    $region8: #{tpu_custom_call.1} parent=1 // pred_region
      _
    $region9: #{tpu_custom_call.1} parent=1 // pred_fallthru
      _
    // Predicated region
    $region10: #{tpu_custom_call.1} parent=1 // pred_check
      _
    $region11: #{tpu_custom_call.1} parent=1 // pred_check_branch
      %26 = sbr.rel (0) target = $region13
    $region12: #{tpu_custom_call.1} parent=1 // pred_region
      _
    $region13: #{tpu_custom_call.1} parent=1 // pred_fallthru
      _
    // Predicated region
    $region14: #{tpu_custom_call.1} parent=1 // pred_check
      _
    $region15: #{tpu_custom_call.1} parent=1 // pred_check_branch
      %28 = sbr.rel (0) target = $region17
    $region16: #{tpu_custom_call.1} parent=1 // pred_region
      _
    $region17: #{tpu_custom_call.1} parent=1 // pred_fallthru
      _
    // Predicated region
    $region18: #{tpu_custom_call.1} parent=1 // pred_check
      _
    $region19: #{tpu_custom_call.1} parent=1 // pred_check_branch
      %30 = sbr.rel (0) target = $region21
    $region20: #{tpu_custom_call.1} parent=1 // pred_region
      _
    $region21: #{tpu_custom_call.1} parent=1 // pred_fallthru
      _
    // Predicated region
    $region22: #{tpu_custom_call.1} parent=1 // pred_check
      _
    $region23: #{tpu_custom_call.1} parent=1 // pred_check_branch
      %32 = sbr.rel (0) target = $region25
    $region24: #{tpu_custom_call.1} parent=1 // pred_region
      _
    $region25: #{tpu_custom_call.1} parent=1 // pred_fallthru
      _
    // Predicated region
    $region26: #{tpu_custom_call.1} parent=1 // pred_check
      _
    $region27: #{tpu_custom_call.1} parent=1 // pred_check_branch
      %34 = sbr.rel (0) target = $region29
    $region28: #{tpu_custom_call.1} parent=1 // pred_region
      _
    $region29: #{tpu_custom_call.1} parent=1 // pred_fallthru
      _
    // Predicated region
    $region30: #{tpu_custom_call.1} parent=1 // pred_check
      _
    $region31: #{tpu_custom_call.1} parent=1 // pred_check_branch
      %36 = sbr.rel (0) target = $region33
    $region32: #{tpu_custom_call.1} parent=1 // pred_region
      _
    $region33: #{tpu_custom_call.1} parent=1 // pred_fallthru
      _
    // Predicated region
    $region34: #{tpu_custom_call.1} parent=1 // pred_check
      _
    $region35: #{tpu_custom_call.1} parent=1 // pred_check_branch
      %38 = sbr.rel (0) target = $region37
    $region36: #{tpu_custom_call.1} parent=1 // pred_region
      _
    $region37: #{tpu_custom_call.1} parent=1 // pred_fallthru
      _
    // Predicated region
    $region38: #{tpu_custom_call.1} parent=1 // pred_check
      _
    $region39: #{tpu_custom_call.1} parent=1 // pred_check_branch
      %40 = sbr.rel (0) target = $region41
    $region40: #{tpu_custom_call.1} parent=1 // pred_region
      _
    $region41: #{tpu_custom_call.1} parent=1 // pred_fallthru
      _
    // Predicated region
    $region42: #{tpu_custom_call.1} parent=1 // pred_check
      _
    $region43: #{tpu_custom_call.1} parent=1 // pred_check_branch
      %42 = sbr.rel (0) target = $region45
    $region44: #{tpu_custom_call.1} parent=1 // pred_region
      _
    $region45: #{tpu_custom_call.1} parent=1 // pred_fallthru
      _
    // Predicated region
    $region46: #{tpu_custom_call.1} parent=1 // pred_check
      _
    $region47: #{tpu_custom_call.1} parent=1 // pred_check_branch
      %44 = sbr.rel (0) target = $region49
    $region48: #{tpu_custom_call.1} parent=1 // pred_region
      _
    $region49: #{tpu_custom_call.1} parent=1 // pred_fallthru
      _
    // Predicated region
    $region50: #{tpu_custom_call.1} parent=1 // pred_check
      _
    $region51: #{tpu_custom_call.1} parent=1 // pred_check_branch
      %46 = sbr.rel (0) target = $region53
    $region52: #{tpu_custom_call.1} parent=1 // pred_region
      _
    $region53: #{tpu_custom_call.1} parent=1 // pred_fallthru
      _
    // Predicated region
    $region54: #{tpu_custom_call.1} parent=1 // pred_check
      _
    $region55: #{tpu_custom_call.1} parent=1 // pred_check_branch
      %48 = sbr.rel (0) target = $region57
    $region56: #{tpu_custom_call.1} parent=1 // pred_region
      _
    $region57: #{tpu_custom_call.1} parent=1 // pred_fallthru
      _
    // Predicated region
    $region58: #{tpu_custom_call.1} parent=1 // pred_check
      _
    $region59: #{tpu_custom_call.1} parent=1 // pred_check_branch
      %50 = sbr.rel (0) target = $region61
    $region60: #{tpu_custom_call.1} parent=1 // pred_region
      _
    $region61: #{tpu_custom_call.1} parent=1 // pred_fallthru
      _
    %v51 = vld [vmem:[%s0] sm:$0xff]
    %v52 = vld [vmem:[%s0 + $0x8] sm:$0xff]
    %v53 = vld [vmem:[%s1] sm:$0x3]
    %v54 = vld [vmem:[%s2] sm:$0x3]
    %v55 = vld [vmem:[%s3] sm:$0xff]
    %v56 = vld [vmem:[%s4] sm:$0x1]
    %v58 = vlaneseq
    %v59 = vshrl.u32 %v58, 7
    %v60 = vsub.s32 0, %v59
    %v61 = vrot.slane %v56, %v60
    %vm63 = vcmask 64512
    %v65 = vsel %vm63, %v51, 0
    %v68 = vsel %vm63, %v52, 0
    %70 = vmatprep.subr.mxu0 0.0
    %71 = vmatpush1.msra.mxu0 %v55
    %72 = vmatprep.subr.mxu0 0.0
    %73 = vmatpush1.msra.mxu0 0.0
    %74 = vmatprep.subr.mxu0 0.0
    %75 = vmatpush1.msra.mxu0 0.0
    %76 = vmatprep.subr.mxu0 0.0
    %77 = vmatpush1.msra.mxu0 0.0
    %78 = vmatprep.subr.mxu0 0.0
    %79 = vmatpush1.msra.mxu0 0.0
    %80 = vmatprep.subr.mxu0 0.0
    %81 = vmatpush1.msra.mxu0 0.0
    %82 = vmatprep.subr.mxu0 0.0
    %83 = vmatpush1.msra.mxu0 0.0
    %84 = vmatprep.subr.mxu0 0.0
    %85 = vmatpush1.msra.mxu0 0.0
    %86 = vmatprep.subr.mxu0 0.0
    %87 = vmatpush1.msra.mxu0 0.0
    %88 = vmatprep.subr.mxu0 0.0
    %89 = vmatpush1.msra.mxu0 0.0
    %90 = vmatprep.subr.mxu0 0.0
    %91 = vmatpush1.msra.mxu0 0.0
    %92 = vmatprep.subr.mxu0 0.0
    %93 = vmatpush1.msra.mxu0 0.0
    %94 = vmatprep.subr.mxu0 0.0
    %95 = vmatpush1.msra.mxu0 0.0
    %96 = vmatprep.subr.mxu0 0.0
    %97 = vmatpush1.msra.mxu0 0.0
    %98 = vmatprep.subr.mxu0 0.0
    %99 = vmatpush1.msra.mxu0 0.0
    %100 = vmatprep.subr.mxu0 0.0
    %101 = vmatpush1.msra.mxu0 0.0
    %102 = vmatprep.subr.mxu0 0.0
    %103 = vmatpush1.msra.mxu0 0.0
    %104 = vmatprep.subr.mxu0 0.0
    %105 = vmatpush1.msra.mxu0 0.0
    %106 = vmatprep.subr.mxu0 0.0
    %107 = vmatpush1.msra.mxu0 0.0
    %108 = vmatprep.subr.mxu0 0.0
    %109 = vmatpush1.msra.mxu0 0.0
    %110 = vmatprep.subr.mxu0 0.0
    %111 = vmatpush1.msra.mxu0 0.0
    %112 = vmatprep.subr.mxu0 0.0
    %113 = vmatpush1.msra.mxu0 0.0
    %114 = vmatprep.subr.mxu0 0.0
    %115 = vmatpush1.msra.mxu0 0.0
    %116 = vmatprep.subr.mxu0 0.0
    %117 = vmatpush1.msra.mxu0 0.0
    %118 = vmatprep.subr.mxu0 0.0
    %119 = vmatpush1.msra.mxu0 0.0
    %120 = vmatprep.subr.mxu0 0.0
    %121 = vmatpush1.msra.mxu0 0.0
    %122 = vmatprep.subr.mxu0 0.0
    %123 = vmatpush1.msra.mxu0 0.0
    %124 = vmatprep.subr.mxu0 0.0
    %125 = vmatpush1.msra.mxu0 0.0
    %126 = vmatprep.subr.mxu0 0.0
    %127 = vmatpush1.msra.mxu0 0.0
    %128 = vmatprep.subr.mxu0 0.0
    %129 = vmatpush1.msra.mxu0 0.0
    %130 = vmatprep.subr.mxu0 0.0
    %131 = vmatpush1.msra.mxu0 0.0
    %132 = vmatprep.subr.mxu0 0.0
    %133 = vmatpush1.msra.mxu0 0.0
    %134 = vmatprep.mubr.f32.mxu0 0.0
    %135 = vmatmul.mubr.f32.gmra.mrb[0].mxu0 %v65
    %v136 = vpop.f32.mrb[0].mxu0
    %v137 = vadd.f32 %v61, %v136
    %v138 = vpop.f32.mrb[0].mxu0
    %139 = vmatprep.mubr.f32.mxu0 0.0
    %140 = vmatmul.mubr.f32.gmra.mrb[0].mxu0 %v68
    %v141 = vpop.f32.mrb[0].mxu0
    %v142 = vadd.f32 %v61, %v141
    %v143 = vpop.f32.mrb[0].mxu0
    %144 = vdwg.mxu0
    %vm145 = vcmask 130048
    %v147 = vsel %vm145, %v53, 0
    %149 = vmatprep.subr.mxu0 0.0
    %150 = vmatpush1.msra.mxu0 %v137
    %151 = vmatprep.subr.mxu0 0.0
    %152 = vmatpush1.msra.mxu0 %v142
    %153 = vmatprep.subr.mxu0 0.0
    %154 = vmatpush1.msra.mxu0 0.0
    %155 = vmatprep.subr.mxu0 0.0
    %156 = vmatpush1.msra.mxu0 0.0
    %157 = vmatprep.subr.mxu0 0.0
    %158 = vmatpush1.msra.mxu0 0.0
    %159 = vmatprep.subr.mxu0 0.0
    %160 = vmatpush1.msra.mxu0 0.0
    %161 = vmatprep.subr.mxu0 0.0
    %162 = vmatpush1.msra.mxu0 0.0
    %163 = vmatprep.subr.mxu0 0.0
    %164 = vmatpush1.msra.mxu0 0.0
    %165 = vmatprep.subr.mxu0 0.0
    %166 = vmatpush1.msra.mxu0 0.0
    %167 = vmatprep.subr.mxu0 0.0
    %168 = vmatpush1.msra.mxu0 0.0
    %169 = vmatprep.subr.mxu0 0.0
    %170 = vmatpush1.msra.mxu0 0.0
    %171 = vmatprep.subr.mxu0 0.0
    %172 = vmatpush1.msra.mxu0 0.0
    %173 = vmatprep.subr.mxu0 0.0
    %174 = vmatpush1.msra.mxu0 0.0
    %175 = vmatprep.subr.mxu0 0.0
    %176 = vmatpush1.msra.mxu0 0.0
    %177 = vmatprep.subr.mxu0 0.0
    %178 = vmatpush1.msra.mxu0 0.0
    %179 = vmatprep.subr.mxu0 0.0
    %180 = vmatpush1.msra.mxu0 0.0
    %181 = vmatprep.subr.mxu0 0.0
    %182 = vmatpush1.msra.mxu0 0.0
    %183 = vmatprep.subr.mxu0 0.0
    %184 = vmatpush1.msra.mxu0 0.0
    %185 = vmatprep.subr.mxu0 0.0
    %186 = vmatpush1.msra.mxu0 0.0
    %187 = vmatprep.subr.mxu0 0.0
    %188 = vmatpush1.msra.mxu0 0.0
    %189 = vmatprep.subr.mxu0 0.0
    %190 = vmatpush1.msra.mxu0 0.0
    %191 = vmatprep.subr.mxu0 0.0
    %192 = vmatpush1.msra.mxu0 0.0
    %193 = vmatprep.subr.mxu0 0.0
    %194 = vmatpush1.msra.mxu0 0.0
    %195 = vmatprep.subr.mxu0 0.0
    %196 = vmatpush1.msra.mxu0 0.0
    %197 = vmatprep.subr.mxu0 0.0
    %198 = vmatpush1.msra.mxu0 0.0
    %199 = vmatprep.subr.mxu0 0.0
    %200 = vmatpush1.msra.mxu0 0.0
    %201 = vmatprep.subr.mxu0 0.0
    %202 = vmatpush1.msra.mxu0 0.0
    %203 = vmatprep.subr.mxu0 0.0
    %204 = vmatpush1.msra.mxu0 0.0
    %205 = vmatprep.subr.mxu0 0.0
    %206 = vmatpush1.msra.mxu0 0.0
    %207 = vmatprep.subr.mxu0 0.0
    %208 = vmatpush1.msra.mxu0 0.0
    %209 = vmatprep.subr.mxu0 0.0
    %210 = vmatpush1.msra.mxu0 0.0
    %211 = vmatprep.subr.mxu0 0.0
    %212 = vmatpush1.msra.mxu0 0.0
    %213 = vmatprep.mubr.f32.mxu0 0.0
    %214 = vmatmul.mubr.f32.gmra.mrb[0].mxu0 %v147
    %v215 = vpop.f32.mrb[0].mxu0
    %v216 = vadd.f32 0.0, %v215
    %v217 = vpop.f32.mrb[0].mxu0
    %218 = vdwg.mxu0
    %v219 = vmax.f32 %v54, 1.0
    %v220 = vrcp.pop %v219
    %222 = vset.pattern.permute.xlu0 0
    %223 = vperm.xlu0 %222, %v220
    %v224 = vpop.permute.xlu0 %223
    %v226 = vmul.f32 %v216, %v224
    %v227 = vlaneseq
    %v228 = vshrl.u32 %v227, 7
    %v229 = vsub.s32 0, %v228
    %v230 = vrot.slane %v53, %v229
    %232 = vbcast.lane.b32.xlu0 %v230, 256
    %v233 = vpop.permute.xlu0 %232
    %s235 = sor.u32 256, 8
    %236 = vbcast.lane.b32.xlu0 %v230, %s235
    %v237 = vpop.permute.xlu0 %236
    %v238 = vlaneseq
    %v239 = vshrl.u32 %v238, 7
    %v240 = vsub.s32 1, %v239
    %v241 = vrot.slane %v53, %v240
    %243 = vbcast.lane.b32.xlu0 %v241, 256
    %v244 = vpop.permute.xlu0 %243
    %s246 = sor.u32 256, 8
    %247 = vbcast.lane.b32.xlu0 %v241, %s246
    %v248 = vpop.permute.xlu0 %247
    %vm249 = vcmp.gt.f32.partialorder %v233, 0.0
    %vm250 = vcmp.gt.f32.partialorder %v237, 0.0
    %vm251 = vcmp.gt.f32.partialorder %v244, 0.0
    %vm252 = vcmp.gt.f32.partialorder %v248, 0.0
    %v253 = vsel %vm249, 1, 0
    %v254 = vsel %vm250, 1, 0
    %v255 = vsel %vm251, 1, 0
    %v256 = vsel %vm252, 1, 0
    %vm257 = vcmp.eq.s32.totalorder %v253, 1
    %vm258 = vcmp.eq.s32.totalorder %v254, 1
    %vm259 = vcmp.eq.s32.totalorder %v255, 1
    %vm260 = vcmp.eq.s32.totalorder %v256, 1
    %v261 = vsel %vm257, %v137, -inf
    %v262 = vsel %vm258, %v142, -inf
    %v263 = vsel %vm259, %v137, -inf
    %v264 = vsel %vm260, %v142, -inf
    %vm265 = vcmask 261120
    %v266 = vsel %vm265, %v261, -inf
    %v267 = vsel %vm265, %v262, -inf
    %v268 = vmax.f32 %v266, %v267
    %v269 = vrot.slane %v268, 4
    %v270 = vmax.f32 %v268, %v269
    %v271 = vrot.slane %v270, 2
    %v272 = vmax.f32 %v270, %v271
    %v273 = vrot.slane %v272, 1
    %v274 = vmax.f32 %v272, %v273
    %v275 = vsel %vm265, %v263, -inf
    %v276 = vsel %vm265, %v264, -inf
    %v277 = vmax.f32 %v275, %v276
    %v278 = vrot.slane %v277, 4
    %v279 = vmax.f32 %v277, %v278
    %v280 = vrot.slane %v279, 2
    %v281 = vmax.f32 %v279, %v280
    %v282 = vrot.slane %v281, 1
    %v283 = vmax.f32 %v281, %v282
    %vm284 = vcmp.gt.f32.partialorder %v54, 0.0
    %v285 = vsel %vm284, 1, 0
    %286 = vset.pattern.permute.xlu0 0
    %287 = vperm.xlu0 %286, %v285
    %v288 = vpop.permute.xlu0 %287
    %vm289 = vcmp.eq.s32.totalorder %v288, 1
    %vm292 = vcmask 1041409
    %v293 = vsel %vm292, %v283, %v274
    %v295 = vsel %vm289, %v293, 0.0
    %297 = vrot.lane.b32.xlu0 %v226, 32
    %v298 = vpop.permute.xlu0 %297
    %301 = vrot.lane.b32.xlu0 %v295, 64
    %v302 = vpop.permute.xlu0 %301
    %v304 = vsel %vm265, %v216, %v298
    %vm305 = vcmask 523264
    %v306 = vsel %vm305, %v304, %v302
    %v307 = vld [vmem:[%s5] sm:$0xff]
    %v308 = vld [vmem:[%s5 + $0x8] sm:$0xff]
    %v309 = vld [vmem:[%s5 + $0x10] sm:$0xff]
    %v310 = vld [vmem:[%s5 + $0x18] sm:$0xff]
    %v311 = vld [vmem:[%s6] sm:$0x1]
    %v313 = vlaneseq
    %v314 = vshrl.u32 %v313, 7
    %v315 = vsub.s32 0, %v314
    %v316 = vrot.slane %v311, %v315
    %v319 = vsel %vm265, %v137, 0
    %v322 = vsel %vm265, %v142, 0
    %324 = vmatprep.subr.mxu0 0.0
    %325 = vmatpush1.msra.mxu0 %v307
    %326 = vmatprep.subr.mxu0 0.0
    %327 = vmatpush1.msra.mxu0 %v308
    %328 = vmatprep.subr.mxu0 0.0
    %329 = vmatpush1.msra.mxu0 %v309
    %330 = vmatprep.subr.mxu0 0.0
    %331 = vmatpush1.msra.mxu0 %v310
    %332 = vmatprep.subr.mxu0 0.0
    %333 = vmatpush1.msra.mxu0 0.0
    %334 = vmatprep.subr.mxu0 0.0
    %335 = vmatpush1.msra.mxu0 0.0
    %336 = vmatprep.subr.mxu0 0.0
    %337 = vmatpush1.msra.mxu0 0.0
    %338 = vmatprep.subr.mxu0 0.0
    %339 = vmatpush1.msra.mxu0 0.0
    %340 = vmatprep.subr.mxu0 0.0
    %341 = vmatpush1.msra.mxu0 0.0
    %342 = vmatprep.subr.mxu0 0.0
    %343 = vmatpush1.msra.mxu0 0.0
    %344 = vmatprep.subr.mxu0 0.0
    %345 = vmatpush1.msra.mxu0 0.0
    %346 = vmatprep.subr.mxu0 0.0
    %347 = vmatpush1.msra.mxu0 0.0
    %348 = vmatprep.subr.mxu0 0.0
    %349 = vmatpush1.msra.mxu0 0.0
    %350 = vmatprep.subr.mxu0 0.0
    %351 = vmatpush1.msra.mxu0 0.0
    %352 = vmatprep.subr.mxu0 0.0
    %353 = vmatpush1.msra.mxu0 0.0
    %354 = vmatprep.subr.mxu0 0.0
    %355 = vmatpush1.msra.mxu0 0.0
    %356 = vmatprep.subr.mxu0 0.0
    %357 = vmatpush1.msra.mxu0 0.0
    %358 = vmatprep.subr.mxu0 0.0
    %359 = vmatpush1.msra.mxu0 0.0
    %360 = vmatprep.subr.mxu0 0.0
    %361 = vmatpush1.msra.mxu0 0.0
    %362 = vmatprep.subr.mxu0 0.0
    %363 = vmatpush1.msra.mxu0 0.0
    %364 = vmatprep.subr.mxu0 0.0
    %365 = vmatpush1.msra.mxu0 0.0
    %366 = vmatprep.subr.mxu0 0.0
    %367 = vmatpush1.msra.mxu0 0.0
    %368 = vmatprep.subr.mxu0 0.0
    %369 = vmatpush1.msra.mxu0 0.0
    %370 = vmatprep.subr.mxu0 0.0
    %371 = vmatpush1.msra.mxu0 0.0
    %372 = vmatprep.subr.mxu0 0.0
    %373 = vmatpush1.msra.mxu0 0.0
    %374 = vmatprep.subr.mxu0 0.0
    %375 = vmatpush1.msra.mxu0 0.0
    %376 = vmatprep.subr.mxu0 0.0
    %377 = vmatpush1.msra.mxu0 0.0
    %378 = vmatprep.subr.mxu0 0.0
    %379 = vmatpush1.msra.mxu0 0.0
    %380 = vmatprep.subr.mxu0 0.0
    %381 = vmatpush1.msra.mxu0 0.0
    %382 = vmatprep.subr.mxu0 0.0
    %383 = vmatpush1.msra.mxu0 0.0
    %384 = vmatprep.subr.mxu0 0.0
    %385 = vmatpush1.msra.mxu0 0.0
    %386 = vmatprep.subr.mxu0 0.0
    %387 = vmatpush1.msra.mxu0 0.0
    %388 = vmatprep.mubr.f32.mxu0 0.0
    %389 = vmatmul.mubr.f32.gmra.mrb[0].mxu0 %v319
    %v390 = vpop.f32.mrb[0].mxu0
    %v391 = vadd.f32 %v316, %v390
    %v392 = vpop.f32.mrb[0].mxu0
    %393 = vmatprep.mubr.f32.mxu0 0.0
    %394 = vmatmul.mubr.f32.gmra.mrb[0].mxu0 %v322
    %v395 = vpop.f32.mrb[0].mxu0
    %v396 = vadd.f32 %v316, %v395
    %v397 = vpop.f32.mrb[0].mxu0
    %398 = vdwg.mxu0
    %v399 = vmax.f32 %v391, 0.0
    %v400 = vmax.f32 %v396, 0.0
    %401 = vmatprep.subr.mxu0 0.0
    %402 = vmatpush1.msra.mxu0 %v399
    %403 = vmatprep.subr.mxu0 0.0
    %404 = vmatpush1.msra.mxu0 %v400
    %405 = vmatprep.subr.mxu0 0.0
    %406 = vmatpush1.msra.mxu0 0.0
    %407 = vmatprep.subr.mxu0 0.0
    %408 = vmatpush1.msra.mxu0 0.0
    %409 = vmatprep.subr.mxu0 0.0
    %410 = vmatpush1.msra.mxu0 0.0
    %411 = vmatprep.subr.mxu0 0.0
    %412 = vmatpush1.msra.mxu0 0.0
    %413 = vmatprep.subr.mxu0 0.0
    %414 = vmatpush1.msra.mxu0 0.0
    %415 = vmatprep.subr.mxu0 0.0
    %416 = vmatpush1.msra.mxu0 0.0
    %417 = vmatprep.subr.mxu0 0.0
    %418 = vmatpush1.msra.mxu0 0.0
    %419 = vmatprep.subr.mxu0 0.0
    %420 = vmatpush1.msra.mxu0 0.0
    %421 = vmatprep.subr.mxu0 0.0
    %422 = vmatpush1.msra.mxu0 0.0
    %423 = vmatprep.subr.mxu0 0.0
    %424 = vmatpush1.msra.mxu0 0.0
    %425 = vmatprep.subr.mxu0 0.0
    %426 = vmatpush1.msra.mxu0 0.0
    %427 = vmatprep.subr.mxu0 0.0
    %428 = vmatpush1.msra.mxu0 0.0
    %429 = vmatprep.subr.mxu0 0.0
    %430 = vmatpush1.msra.mxu0 0.0
    %431 = vmatprep.subr.mxu0 0.0
    %432 = vmatpush1.msra.mxu0 0.0
    %433 = vmatprep.subr.mxu0 0.0
    %434 = vmatpush1.msra.mxu0 0.0
    %435 = vmatprep.subr.mxu0 0.0
    %436 = vmatpush1.msra.mxu0 0.0
    %437 = vmatprep.subr.mxu0 0.0
    %438 = vmatpush1.msra.mxu0 0.0
    %439 = vmatprep.subr.mxu0 0.0
    %440 = vmatpush1.msra.mxu0 0.0
    %441 = vmatprep.subr.mxu0 0.0
    %442 = vmatpush1.msra.mxu0 0.0
    %443 = vmatprep.subr.mxu0 0.0
    %444 = vmatpush1.msra.mxu0 0.0
    %445 = vmatprep.subr.mxu0 0.0
    %446 = vmatpush1.msra.mxu0 0.0
    %447 = vmatprep.subr.mxu0 0.0
    %448 = vmatpush1.msra.mxu0 0.0
    %449 = vmatprep.subr.mxu0 0.0
    %450 = vmatpush1.msra.mxu0 0.0
    %451 = vmatprep.subr.mxu0 0.0
    %452 = vmatpush1.msra.mxu0 0.0
    %453 = vmatprep.subr.mxu0 0.0
    %454 = vmatpush1.msra.mxu0 0.0
    %455 = vmatprep.subr.mxu0 0.0
    %456 = vmatpush1.msra.mxu0 0.0
    %457 = vmatprep.subr.mxu0 0.0
    %458 = vmatpush1.msra.mxu0 0.0
    %459 = vmatprep.subr.mxu0 0.0
    %460 = vmatpush1.msra.mxu0 0.0
    %461 = vmatprep.subr.mxu0 0.0
    %462 = vmatpush1.msra.mxu0 0.0
    %463 = vmatprep.subr.mxu0 0.0
    %464 = vmatpush1.msra.mxu0 0.0
    %465 = vmatprep.mubr.f32.mxu0 0.0
    %466 = vmatmul.mubr.f32.gmra.mrb[0].mxu0 %v147
    %v467 = vpop.f32.mrb[0].mxu0
    %v468 = vadd.f32 0.0, %v467
    %v469 = vpop.f32.mrb[0].mxu0
    %470 = vdwg.mxu0
    %v471 = vmul.f32 %v468, %v224
    %v472 = vsel %vm257, %v399, -inf
    %v473 = vsel %vm258, %v400, -inf
    %v474 = vsel %vm259, %v399, -inf
    %v475 = vsel %vm260, %v400, -inf
    %v476 = vsel %vm265, %v472, -inf
    %v477 = vsel %vm265, %v473, -inf
    %v478 = vmax.f32 %v476, %v477
    %v479 = vrot.slane %v478, 4
    %v480 = vmax.f32 %v478, %v479
    %v481 = vrot.slane %v480, 2
    %v482 = vmax.f32 %v480, %v481
    %v483 = vrot.slane %v482, 1
    %v484 = vmax.f32 %v482, %v483
    %v485 = vsel %vm265, %v474, -inf
    %v486 = vsel %vm265, %v475, -inf
    %v487 = vmax.f32 %v485, %v486
    %v488 = vrot.slane %v487, 4
    %v489 = vmax.f32 %v487, %v488
    %v490 = vrot.slane %v489, 2
    %v491 = vmax.f32 %v489, %v490
    %v492 = vrot.slane %v491, 1
    %v493 = vmax.f32 %v491, %v492
    %v496 = vsel %vm292, %v493, %v484
    %v498 = vsel %vm289, %v496, 0.0
    %500 = vrot.lane.b32.xlu0 %v471, 32
    %v501 = vpop.permute.xlu0 %500
    %504 = vrot.lane.b32.xlu0 %v498, 64
    %v505 = vpop.permute.xlu0 %504
    %v507 = vsel %vm265, %v468, %v501
    %v508 = vsel %vm305, %v507, %v505
    %v509 = vadd.f32 %v306, %v508
    %v510 = vld [vmem:[%s7] sm:$0xff]
    %v511 = vld [vmem:[%s7 + $0x8] sm:$0xff]
    %v512 = vld [vmem:[%s7 + $0x10] sm:$0xff]
    %v513 = vld [vmem:[%s7 + $0x18] sm:$0xff]
    %v514 = vld [vmem:[%s8] sm:$0x1]
    %v516 = vlaneseq
    %v517 = vshrl.u32 %v516, 7
    %v518 = vsub.s32 0, %v517
    %v519 = vrot.slane %v514, %v518
    %v522 = vsel %vm265, %v399, 0
    %v525 = vsel %vm265, %v400, 0
    %527 = vmatprep.subr.mxu0 0.0
    %528 = vmatpush1.msra.mxu0 %v510
    %529 = vmatprep.subr.mxu0 0.0
    %530 = vmatpush1.msra.mxu0 %v511
    %531 = vmatprep.subr.mxu0 0.0
    %532 = vmatpush1.msra.mxu0 %v512
    %533 = vmatprep.subr.mxu0 0.0
    %534 = vmatpush1.msra.mxu0 %v513
    %535 = vmatprep.subr.mxu0 0.0
    %536 = vmatpush1.msra.mxu0 0.0
    %537 = vmatprep.subr.mxu0 0.0
    %538 = vmatpush1.msra.mxu0 0.0
    %539 = vmatprep.subr.mxu0 0.0
    %540 = vmatpush1.msra.mxu0 0.0
    %541 = vmatprep.subr.mxu0 0.0
    %542 = vmatpush1.msra.mxu0 0.0
    %543 = vmatprep.subr.mxu0 0.0
    %544 = vmatpush1.msra.mxu0 0.0
    %545 = vmatprep.subr.mxu0 0.0
    %546 = vmatpush1.msra.mxu0 0.0
    %547 = vmatprep.subr.mxu0 0.0
    %548 = vmatpush1.msra.mxu0 0.0
    %549 = vmatprep.subr.mxu0 0.0
    %550 = vmatpush1.msra.mxu0 0.0
    %551 = vmatprep.subr.mxu0 0.0
    %552 = vmatpush1.msra.mxu0 0.0
    %553 = vmatprep.subr.mxu0 0.0
    %554 = vmatpush1.msra.mxu0 0.0
    %555 = vmatprep.subr.mxu0 0.0
    %556 = vmatpush1.msra.mxu0 0.0
    %557 = vmatprep.subr.mxu0 0.0
    %558 = vmatpush1.msra.mxu0 0.0
    %559 = vmatprep.subr.mxu0 0.0
    %560 = vmatpush1.msra.mxu0 0.0
    %561 = vmatprep.subr.mxu0 0.0
    %562 = vmatpush1.msra.mxu0 0.0
    %563 = vmatprep.subr.mxu0 0.0
    %564 = vmatpush1.msra.mxu0 0.0
    %565 = vmatprep.subr.mxu0 0.0
    %566 = vmatpush1.msra.mxu0 0.0
    %567 = vmatprep.subr.mxu0 0.0
    %568 = vmatpush1.msra.mxu0 0.0
    %569 = vmatprep.subr.mxu0 0.0
    %570 = vmatpush1.msra.mxu0 0.0
    %571 = vmatprep.subr.mxu0 0.0
    %572 = vmatpush1.msra.mxu0 0.0
    %573 = vmatprep.subr.mxu0 0.0
    %574 = vmatpush1.msra.mxu0 0.0
    %575 = vmatprep.subr.mxu0 0.0
    %576 = vmatpush1.msra.mxu0 0.0
    %577 = vmatprep.subr.mxu0 0.0
    %578 = vmatpush1.msra.mxu0 0.0
    %579 = vmatprep.subr.mxu0 0.0
    %580 = vmatpush1.msra.mxu0 0.0
    %581 = vmatprep.subr.mxu0 0.0
    %582 = vmatpush1.msra.mxu0 0.0
    %583 = vmatprep.subr.mxu0 0.0
    %584 = vmatpush1.msra.mxu0 0.0
    %585 = vmatprep.subr.mxu0 0.0
    %586 = vmatpush1.msra.mxu0 0.0
    %587 = vmatprep.subr.mxu0 0.0
    %588 = vmatpush1.msra.mxu0 0.0
    %589 = vmatprep.subr.mxu0 0.0
    %590 = vmatpush1.msra.mxu0 0.0
    %591 = vmatprep.mubr.f32.mxu0 0.0
    %592 = vmatmul.mubr.f32.gmra.mrb[0].mxu0 %v522
    %v593 = vpop.f32.mrb[0].mxu0
    %v594 = vadd.f32 %v519, %v593
    %v595 = vpop.f32.mrb[0].mxu0
    %596 = vmatprep.mubr.f32.mxu0 0.0
    %597 = vmatmul.mubr.f32.gmra.mrb[0].mxu0 %v525
    %v598 = vpop.f32.mrb[0].mxu0
    %v599 = vadd.f32 %v519, %v598
    %v600 = vpop.f32.mrb[0].mxu0
    %601 = vdwg.mxu0
    %v602 = vmax.f32 %v594, 0.0
    %v603 = vmax.f32 %v599, 0.0
    %604 = vmatprep.subr.mxu0 0.0
    %605 = vmatpush1.msra.mxu0 %v602
    %606 = vmatprep.subr.mxu0 0.0
    %607 = vmatpush1.msra.mxu0 %v603
    %608 = vmatprep.subr.mxu0 0.0
    %609 = vmatpush1.msra.mxu0 0.0
    %610 = vmatprep.subr.mxu0 0.0
    %611 = vmatpush1.msra.mxu0 0.0
    %612 = vmatprep.subr.mxu0 0.0
    %613 = vmatpush1.msra.mxu0 0.0
    %614 = vmatprep.subr.mxu0 0.0
    %615 = vmatpush1.msra.mxu0 0.0
    %616 = vmatprep.subr.mxu0 0.0
    %617 = vmatpush1.msra.mxu0 0.0
    %618 = vmatprep.subr.mxu0 0.0
    %619 = vmatpush1.msra.mxu0 0.0
    %620 = vmatprep.subr.mxu0 0.0
    %621 = vmatpush1.msra.mxu0 0.0
    %622 = vmatprep.subr.mxu0 0.0
    %623 = vmatpush1.msra.mxu0 0.0
    %624 = vmatprep.subr.mxu0 0.0
    %625 = vmatpush1.msra.mxu0 0.0
    %626 = vmatprep.subr.mxu0 0.0
    %627 = vmatpush1.msra.mxu0 0.0
    %628 = vmatprep.subr.mxu0 0.0
    %629 = vmatpush1.msra.mxu0 0.0
    %630 = vmatprep.subr.mxu0 0.0
    %631 = vmatpush1.msra.mxu0 0.0
    %632 = vmatprep.subr.mxu0 0.0
    %633 = vmatpush1.msra.mxu0 0.0
    %634 = vmatprep.subr.mxu0 0.0
    %635 = vmatpush1.msra.mxu0 0.0
    %636 = vmatprep.subr.mxu0 0.0
    %637 = vmatpush1.msra.mxu0 0.0
    %638 = vmatprep.subr.mxu0 0.0
    %639 = vmatpush1.msra.mxu0 0.0
    %640 = vmatprep.subr.mxu0 0.0
    %641 = vmatpush1.msra.mxu0 0.0
    %642 = vmatprep.subr.mxu0 0.0
    %643 = vmatpush1.msra.mxu0 0.0
    %644 = vmatprep.subr.mxu0 0.0
    %645 = vmatpush1.msra.mxu0 0.0
    %646 = vmatprep.subr.mxu0 0.0
    %647 = vmatpush1.msra.mxu0 0.0
    %648 = vmatprep.subr.mxu0 0.0
    %649 = vmatpush1.msra.mxu0 0.0
    %650 = vmatprep.subr.mxu0 0.0
    %651 = vmatpush1.msra.mxu0 0.0
    %652 = vmatprep.subr.mxu0 0.0
    %653 = vmatpush1.msra.mxu0 0.0
    %654 = vmatprep.subr.mxu0 0.0
    %655 = vmatpush1.msra.mxu0 0.0
    %656 = vmatprep.subr.mxu0 0.0
    %657 = vmatpush1.msra.mxu0 0.0
    %658 = vmatprep.subr.mxu0 0.0
    %659 = vmatpush1.msra.mxu0 0.0
    %660 = vmatprep.subr.mxu0 0.0
    %661 = vmatpush1.msra.mxu0 0.0
    %662 = vmatprep.subr.mxu0 0.0
    %663 = vmatpush1.msra.mxu0 0.0
    %664 = vmatprep.subr.mxu0 0.0
    %665 = vmatpush1.msra.mxu0 0.0
    %666 = vmatprep.subr.mxu0 0.0
    %667 = vmatpush1.msra.mxu0 0.0
    %668 = vmatprep.mubr.f32.mxu0 0.0
    %669 = vmatmul.mubr.f32.gmra.mrb[0].mxu0 %v147
    %v670 = vpop.f32.mrb[0].mxu0
    %v671 = vadd.f32 0.0, %v670
    %v672 = vpop.f32.mrb[0].mxu0
    %673 = vdwg.mxu0
    %v674 = vmul.f32 %v671, %v224
    %v675 = vsel %vm257, %v602, -inf
    %v676 = vsel %vm258, %v603, -inf
    %v677 = vsel %vm259, %v602, -inf
    %v678 = vsel %vm260, %v603, -inf
    %v679 = vsel %vm265, %v675, -inf
    %v680 = vsel %vm265, %v676, -inf
    %v681 = vmax.f32 %v679, %v680
    %v682 = vrot.slane %v681, 4
    %v683 = vmax.f32 %v681, %v682
    %v684 = vrot.slane %v683, 2
    %v685 = vmax.f32 %v683, %v684
    %v686 = vrot.slane %v685, 1
    %v687 = vmax.f32 %v685, %v686
    %v688 = vsel %vm265, %v677, -inf
    %v689 = vsel %vm265, %v678, -inf
    %v690 = vmax.f32 %v688, %v689
    %v691 = vrot.slane %v690, 4
    %v692 = vmax.f32 %v690, %v691
    %v693 = vrot.slane %v692, 2
    %v694 = vmax.f32 %v692, %v693
    %v695 = vrot.slane %v694, 1
    %v696 = vmax.f32 %v694, %v695
    %v699 = vsel %vm292, %v696, %v687
    %v701 = vsel %vm289, %v699, 0.0
    %703 = vrot.lane.b32.xlu0 %v674, 32
    %v704 = vpop.permute.xlu0 %703
    %707 = vrot.lane.b32.xlu0 %v701, 64
    %v708 = vpop.permute.xlu0 %707
    %v710 = vsel %vm265, %v671, %v704
    %v711 = vsel %vm305, %v710, %v708
    %v712 = vadd.f32 %v509, %v711
    %v713 = vld [vmem:[%s9] sm:$0xff]
    %v714 = vld [vmem:[%s9 + $0x8] sm:$0xff]
    %v715 = vld [vmem:[%s9 + $0x10] sm:$0xff]
    %v716 = vld [vmem:[%s9 + $0x18] sm:$0xff]
    %v717 = vld [vmem:[%s9 + $0x20] sm:$0xff]
    %v718 = vld [vmem:[%s9 + $0x28] sm:$0xff]
    %v719 = vld [vmem:[%s9 + $0x30] sm:$0xff]
    %v720 = vld [vmem:[%s9 + $0x38] sm:$0xff]
    %v721 = vld [vmem:[%s9 + $0x40] sm:$0xff]
    %v722 = vld [vmem:[%s9 + $0x48] sm:$0xff]
    %v723 = vld [vmem:[%s9 + $0x50] sm:$0xff]
    %v724 = vld [vmem:[%s9 + $0x58] sm:$0xff]
    %v725 = vld [vmem:[%s10] sm:$0x1]
    %v727 = vlaneseq
    %v728 = vshrl.u32 %v727, 7
    %v729 = vsub.s32 0, %v728
    %v730 = vrot.slane %v725, %v729
    %vm732 = vcmask 785408
    %v734 = vsel %vm732, %v712, 0
    %736 = vmatprep.subr.mxu0 0.0
    %737 = vmatpush1.msra.mxu0 %v713
    %738 = vmatprep.subr.mxu0 0.0
    %739 = vmatpush1.msra.mxu0 %v714
    %740 = vmatprep.subr.mxu0 0.0
    %741 = vmatpush1.msra.mxu0 %v715
    %742 = vmatprep.subr.mxu0 0.0
    %743 = vmatpush1.msra.mxu0 %v716
    %744 = vmatprep.subr.mxu0 0.0
    %745 = vmatpush1.msra.mxu0 %v717
    %746 = vmatprep.subr.mxu0 0.0
    %747 = vmatpush1.msra.mxu0 %v718
    %748 = vmatprep.subr.mxu0 0.0
    %749 = vmatpush1.msra.mxu0 %v719
    %750 = vmatprep.subr.mxu0 0.0
    %751 = vmatpush1.msra.mxu0 %v720
    %752 = vmatprep.subr.mxu0 0.0
    %753 = vmatpush1.msra.mxu0 %v721
    %754 = vmatprep.subr.mxu0 0.0
    %755 = vmatpush1.msra.mxu0 %v722
    %756 = vmatprep.subr.mxu0 0.0
    %757 = vmatpush1.msra.mxu0 %v723
    %758 = vmatprep.subr.mxu0 0.0
    %759 = vmatpush1.msra.mxu0 %v724
    %760 = vmatprep.subr.mxu0 0.0
    %761 = vmatpush1.msra.mxu0 0.0
    %762 = vmatprep.subr.mxu0 0.0
    %763 = vmatpush1.msra.mxu0 0.0
    %764 = vmatprep.subr.mxu0 0.0
    %765 = vmatpush1.msra.mxu0 0.0
    %766 = vmatprep.subr.mxu0 0.0
    %767 = vmatpush1.msra.mxu0 0.0
    %768 = vmatprep.subr.mxu0 0.0
    %769 = vmatpush1.msra.mxu0 0.0
    %770 = vmatprep.subr.mxu0 0.0
    %771 = vmatpush1.msra.mxu0 0.0
    %772 = vmatprep.subr.mxu0 0.0
    %773 = vmatpush1.msra.mxu0 0.0
    %774 = vmatprep.subr.mxu0 0.0
    %775 = vmatpush1.msra.mxu0 0.0
    %776 = vmatprep.subr.mxu0 0.0
    %777 = vmatpush1.msra.mxu0 0.0
    %778 = vmatprep.subr.mxu0 0.0
    %779 = vmatpush1.msra.mxu0 0.0
    %780 = vmatprep.subr.mxu0 0.0
    %781 = vmatpush1.msra.mxu0 0.0
    %782 = vmatprep.subr.mxu0 0.0
    %783 = vmatpush1.msra.mxu0 0.0
    %784 = vmatprep.subr.mxu0 0.0
    %785 = vmatpush1.msra.mxu0 0.0
    %786 = vmatprep.subr.mxu0 0.0
    %787 = vmatpush1.msra.mxu0 0.0
    %788 = vmatprep.subr.mxu0 0.0
    %789 = vmatpush1.msra.mxu0 0.0
    %790 = vmatprep.subr.mxu0 0.0
    %791 = vmatpush1.msra.mxu0 0.0
    %792 = vmatprep.subr.mxu0 0.0
    %793 = vmatpush1.msra.mxu0 0.0
    %794 = vmatprep.subr.mxu0 0.0
    %795 = vmatpush1.msra.mxu0 0.0
    %796 = vmatprep.subr.mxu0 0.0
    %797 = vmatpush1.msra.mxu0 0.0
    %798 = vmatprep.subr.mxu0 0.0
    %799 = vmatpush1.msra.mxu0 0.0
    %800 = vmatprep.mubr.f32.mxu0 0.0
    %801 = vmatmul.mubr.f32.gmra.mrb[0].mxu0 %v734
    %v802 = vpop.f32.mrb[0].mxu0
    %v803 = vadd.f32 %v730, %v802
    %v804 = vpop.f32.mrb[0].mxu0
    %805 = vdwg.mxu0
    %v806 = vmax.f32 %v803, 0.0
    %v807 = vld [vmem:[%s11] sm:$0xff]
    %v808 = vld [vmem:[%s11 + $0x8] sm:$0xff]
    %v809 = vld [vmem:[%s11 + $0x10] sm:$0xff]
    %v810 = vld [vmem:[%s11 + $0x18] sm:$0xff]
    %v811 = vld [vmem:[%s12] sm:$0x1]
    %v813 = vlaneseq
    %v814 = vshrl.u32 %v813, 7
    %v815 = vsub.s32 0, %v814
    %v816 = vrot.slane %v811, %v815
    %v819 = vsel %vm265, %v806, 0
    %821 = vmatprep.subr.mxu0 0.0
    %822 = vmatpush1.msra.mxu0 %v807
    %823 = vmatprep.subr.mxu0 0.0
    %824 = vmatpush1.msra.mxu0 %v808
    %825 = vmatprep.subr.mxu0 0.0
    %826 = vmatpush1.msra.mxu0 %v809
    %827 = vmatprep.subr.mxu0 0.0
    %828 = vmatpush1.msra.mxu0 %v810
    %829 = vmatprep.subr.mxu0 0.0
    %830 = vmatpush1.msra.mxu0 0.0
    %831 = vmatprep.subr.mxu0 0.0
    %832 = vmatpush1.msra.mxu0 0.0
    %833 = vmatprep.subr.mxu0 0.0
    %834 = vmatpush1.msra.mxu0 0.0
    %835 = vmatprep.subr.mxu0 0.0
    %836 = vmatpush1.msra.mxu0 0.0
    %837 = vmatprep.subr.mxu0 0.0
    %838 = vmatpush1.msra.mxu0 0.0
    %839 = vmatprep.subr.mxu0 0.0
    %840 = vmatpush1.msra.mxu0 0.0
    %841 = vmatprep.subr.mxu0 0.0
    %842 = vmatpush1.msra.mxu0 0.0
    %843 = vmatprep.subr.mxu0 0.0
    %844 = vmatpush1.msra.mxu0 0.0
    %845 = vmatprep.subr.mxu0 0.0
    %846 = vmatpush1.msra.mxu0 0.0
    %847 = vmatprep.subr.mxu0 0.0
    %848 = vmatpush1.msra.mxu0 0.0
    %849 = vmatprep.subr.mxu0 0.0
    %850 = vmatpush1.msra.mxu0 0.0
    %851 = vmatprep.subr.mxu0 0.0
    %852 = vmatpush1.msra.mxu0 0.0
    %853 = vmatprep.subr.mxu0 0.0
    %854 = vmatpush1.msra.mxu0 0.0
    %855 = vmatprep.subr.mxu0 0.0
    %856 = vmatpush1.msra.mxu0 0.0
    %857 = vmatprep.subr.mxu0 0.0
    %858 = vmatpush1.msra.mxu0 0.0
    %859 = vmatprep.subr.mxu0 0.0
    %860 = vmatpush1.msra.mxu0 0.0
    %861 = vmatprep.subr.mxu0 0.0
    %862 = vmatpush1.msra.mxu0 0.0
    %863 = vmatprep.subr.mxu0 0.0
    %864 = vmatpush1.msra.mxu0 0.0
    %865 = vmatprep.subr.mxu0 0.0
    %866 = vmatpush1.msra.mxu0 0.0
    %867 = vmatprep.subr.mxu0 0.0
    %868 = vmatpush1.msra.mxu0 0.0
    %869 = vmatprep.subr.mxu0 0.0
    %870 = vmatpush1.msra.mxu0 0.0
    %871 = vmatprep.subr.mxu0 0.0
    %872 = vmatpush1.msra.mxu0 0.0
    %873 = vmatprep.subr.mxu0 0.0
    %874 = vmatpush1.msra.mxu0 0.0
    %875 = vmatprep.subr.mxu0 0.0
    %876 = vmatpush1.msra.mxu0 0.0
    %877 = vmatprep.subr.mxu0 0.0
    %878 = vmatpush1.msra.mxu0 0.0
    %879 = vmatprep.subr.mxu0 0.0
    %880 = vmatpush1.msra.mxu0 0.0
    %881 = vmatprep.subr.mxu0 0.0
    %882 = vmatpush1.msra.mxu0 0.0
    %883 = vmatprep.subr.mxu0 0.0
    %884 = vmatpush1.msra.mxu0 0.0
    %885 = vmatprep.mubr.f32.mxu0 0.0
    %886 = vmatmul.mubr.f32.gmra.mrb[0].mxu0 %v819
    %v887 = vpop.f32.mrb[0].mxu0
    %v888 = vadd.f32 %v816, %v887
    %v889 = vpop.f32.mrb[0].mxu0
    %890 = vdwg.mxu0
    %v891 = vmax.f32 %v888, 0.0
    %v892 = vld [vmem:[%s13] sm:$0xff]
    %v893 = vld [vmem:[%s13 + $0x8] sm:$0xff]
    %v894 = vld [vmem:[%s14] sm:$0x1]
    %v896 = vlaneseq
    %v897 = vshrl.u32 %v896, 7
    %v898 = vsub.s32 0, %v897
    %v899 = vrot.slane %v894, %v898
    %v902 = vsel %vm145, %v891, 0
    %904 = vmatprep.subr.mxu0 0.0
    %905 = vmatpush1.msra.mxu0 %v892
    %906 = vmatprep.subr.mxu0 0.0
    %907 = vmatpush1.msra.mxu0 %v893
    %908 = vmatprep.subr.mxu0 0.0
    %909 = vmatpush1.msra.mxu0 0.0
    %910 = vmatprep.subr.mxu0 0.0
    %911 = vmatpush1.msra.mxu0 0.0
    %912 = vmatprep.subr.mxu0 0.0
    %913 = vmatpush1.msra.mxu0 0.0
    %914 = vmatprep.subr.mxu0 0.0
    %915 = vmatpush1.msra.mxu0 0.0
    %916 = vmatprep.subr.mxu0 0.0
    %917 = vmatpush1.msra.mxu0 0.0
    %918 = vmatprep.subr.mxu0 0.0
    %919 = vmatpush1.msra.mxu0 0.0
    %920 = vmatprep.subr.mxu0 0.0
    %921 = vmatpush1.msra.mxu0 0.0
    %922 = vmatprep.subr.mxu0 0.0
    %923 = vmatpush1.msra.mxu0 0.0
    %924 = vmatprep.subr.mxu0 0.0
    %925 = vmatpush1.msra.mxu0 0.0
    %926 = vmatprep.subr.mxu0 0.0
    %927 = vmatpush1.msra.mxu0 0.0
    %928 = vmatprep.subr.mxu0 0.0
    %929 = vmatpush1.msra.mxu0 0.0
    %930 = vmatprep.subr.mxu0 0.0
    %931 = vmatpush1.msra.mxu0 0.0
    %932 = vmatprep.subr.mxu0 0.0
    %933 = vmatpush1.msra.mxu0 0.0
    %934 = vmatprep.subr.mxu0 0.0
    %935 = vmatpush1.msra.mxu0 0.0
    %936 = vmatprep.subr.mxu0 0.0
    %937 = vmatpush1.msra.mxu0 0.0
    %938 = vmatprep.subr.mxu0 0.0
    %939 = vmatpush1.msra.mxu0 0.0
    %940 = vmatprep.subr.mxu0 0.0
    %941 = vmatpush1.msra.mxu0 0.0
    %942 = vmatprep.subr.mxu0 0.0
    %943 = vmatpush1.msra.mxu0 0.0
    %944 = vmatprep.subr.mxu0 0.0
    %945 = vmatpush1.msra.mxu0 0.0
    %946 = vmatprep.subr.mxu0 0.0
    %947 = vmatpush1.msra.mxu0 0.0
    %948 = vmatprep.subr.mxu0 0.0
    %949 = vmatpush1.msra.mxu0 0.0
    %950 = vmatprep.subr.mxu0 0.0
    %951 = vmatpush1.msra.mxu0 0.0
    %952 = vmatprep.subr.mxu0 0.0
    %953 = vmatpush1.msra.mxu0 0.0
    %954 = vmatprep.subr.mxu0 0.0
    %955 = vmatpush1.msra.mxu0 0.0
    %956 = vmatprep.subr.mxu0 0.0
    %957 = vmatpush1.msra.mxu0 0.0
    %958 = vmatprep.subr.mxu0 0.0
    %959 = vmatpush1.msra.mxu0 0.0
    %960 = vmatprep.subr.mxu0 0.0
    %961 = vmatpush1.msra.mxu0 0.0
    %962 = vmatprep.subr.mxu0 0.0
    %963 = vmatpush1.msra.mxu0 0.0
    %964 = vmatprep.subr.mxu0 0.0
    %965 = vmatpush1.msra.mxu0 0.0
    %966 = vmatprep.subr.mxu0 0.0
    %967 = vmatpush1.msra.mxu0 0.0
    %968 = vmatprep.mubr.f32.mxu0 0.0
    %969 = vmatmul.mubr.f32.gmra.mrb[0].mxu0 %v902
    %v970 = vpop.f32.mrb[0].mxu0
    %v971 = vadd.f32 %v899, %v970
    %v972 = vpop.f32.mrb[0].mxu0
    %973 = vdwg.mxu0
    %vm974 = vcmask 25600
    %v975 = vsel %vm974, %v971, -inf
    %976 = vmax.xlane.f32.xlu0 %v975
    %v977 = vpop.xlane.xlu0 %976
    %v978 = vsub.f32 %v971, %v977
    %v979 = vmul.f32 %v978, 1.442695
    %v980 = vpow.pop %v979
    %v981 = vsel %vm974, %v980, 0.0
    %982 = vadd.xlane.f32.xlu0 %v981
    %v983 = vpop.xlane.xlu0 %982
    %v984 = vlog2.pop %v983
    %v985 = vmul.f32 %v984, 0.6931472
    %v986 = vadd.f32 %v977, %v985
    %v987 = vsub.f32 %v971, %v986
    %988 = vst.msk [vmem:[#allocation2] sm:$0x3] %vm974, %v987
    // Predicated region
    $region62: #{tpu_custom_call.1} parent=1 // pred_check
      _
    $region63: #{tpu_custom_call.1} parent=1 // pred_check_branch
      %990 = sbr.rel (0) target = $region65
    $region64: #{tpu_custom_call.1} parent=1 // pred_region
      %s992 = ssub.s32 32, 32
      %993 = vsyncadd [#allocation3], %s992
      %s995 = sshll.u32 [#allocation2], 4
      %s996 = int_to_ptr.vmem [resolvable:$true] %s995
      %998 = dma.vmem_to_hbm [thread:$0]  %s996, 32, %s15, [#allocation3]
    $region65: #{tpu_custom_call.1} parent=1 // pred_fallthru
      _
    // Predicated region
    $region66: #{tpu_custom_call.1} parent=1 // pred_check
      _
    $region67: #{tpu_custom_call.1} parent=1 // pred_check_branch
      %1000 = sbr.rel (0) target = $region69
    $region68: #{tpu_custom_call.1} parent=1 // pred_region
      %1001 = dma.done [#allocation3], 32
    $region69: #{tpu_custom_call.1} parent=1 // pred_fallthru
      _
    %1002 = vsyncpa [#allocation3], 1

</llo_original>
